<compile_context>
chip_gen: v5e
topology: v5e:2x2
jax: 0.10.0
libtpu: 0.0.40
codegen_flags: <defaults>
</compile_context>

<pallas_src>
import jax
import jax.numpy as jnp
from jax.experimental import pallas as pl
from jax.experimental.pallas import tpu as pltpu


def _round_up(x, m):
    return ((x + m - 1) // m) * m


def nbeats_block_kernel(
    x_ref,
    w1_ref, b1_ref,
    w2_ref, b2_ref,
    w3_ref, b3_ref,
    w4_ref, b4_ref,
    wout_ref, bout_ref,   # fused, pre-multiplied head: [units, bc_pad+fc_pad], [1, bc_pad+fc_pad]
    out_ref,              # [TB, bc_pad+fc_pad]  lane-dense (128-aligned) output slab
):
    bf16 = jnp.bfloat16

    # fc1..fc4: bf16 MXU dots with f32 accumulation; bias-add/ReLU in f32.
    h = x_ref[...].astype(bf16)
    h = jnp.maximum(
        jnp.dot(h, w1_ref[...], preferred_element_type=jnp.float32) + b1_ref[...], 0.0)
    h = jnp.maximum(
        jnp.dot(h.astype(bf16), w2_ref[...], preferred_element_type=jnp.float32) + b2_ref[...], 0.0)
    h = jnp.maximum(
        jnp.dot(h.astype(bf16), w3_ref[...], preferred_element_type=jnp.float32) + b3_ref[...], 0.0)
    h = jnp.maximum(
        jnp.dot(h.astype(bf16), w4_ref[...], preferred_element_type=jnp.float32) + b4_ref[...], 0.0)

    # Single fused tail: (theta_b @ W_back | theta_f @ W_fore) pre-folded into wout.
    out = jnp.dot(h.astype(bf16), wout_ref[...],
                  preferred_element_type=jnp.float32) + bout_ref[...]

    out_ref[...] = out.astype(out_ref.dtype)


def nbeats_block(x, params, backcast_length, forecast_length, *,
                 block_batch=1024, single_buffer_weights=False):
    """Run the NBeatsBlock forward pass.

    Args:
      x: [batch, backcast_length] float32
      params: dict of weights (pre-transposed to [in, out]) and biases ([1, out]).
      block_batch: batch tile size (sweep 512-2048 for production sizes).
      single_buffer_weights: use pl.Buffered(1) for the resident weight BlockSpecs
        (halves weight VMEM on v7x at large `units`; constant index_map => never re-DMAd).
    Returns:
      (backcast [batch, backcast_length], forecast [batch, forecast_length])
    """
    batch, bc = x.shape
    assert bc == backcast_length
    fc = forecast_length
    units = params["w1"].shape[1]

    # ---- wrapper-side param packing (layout + algebra, done once per call) ----
    # Fold theta projection into the heads (f32 matmul here, then cast to bf16).
    w_back_folded = params["w_theta_b"] @ params["w_backcast"]   # [units, bc]
    w_fore_folded = params["w_theta_f"] @ params["w_forecast"]   # [units, fc]

    # Pad each output block to a multiple of 128 lanes -> unmasked stores and a
    # 128-aligned split point for the wrapper.
    bc_pad = _round_up(bc, 128)
    fc_pad = _round_up(fc, 128)
    n_out = bc_pad + fc_pad

    w_out = jnp.zeros((units, n_out), jnp.float32)
    w_out = w_out.at[:, :bc].set(w_back_folded)
    w_out = w_out.at[:, bc_pad:bc_pad + fc].set(w_fore_folded)
    b_out = jnp.zeros((1, n_out), jnp.float32)
    b_out = b_out.at[:, :bc].set(params["b_backcast"])
    b_out = b_out.at[:, bc_pad:bc_pad + fc].set(params["b_forecast"])

    # Weights in bf16 (MXU-native on v5e/v6e/v7x); biases stay f32 (f32 bias-add).
    w1 = params["w1"].astype(jnp.bfloat16)
    w2 = params["w2"].astype(jnp.bfloat16)
    w3 = params["w3"].astype(jnp.bfloat16)
    w4 = params["w4"].astype(jnp.bfloat16)
    w_out = w_out.astype(jnp.bfloat16)
    b1, b2, b3, b4 = params["b1"], params["b2"], params["b3"], params["b4"]

    # ---- batch tiling ----
    if batch <= 8:
        tb = batch
    else:
        tb = min(block_batch, batch)
        tb = min(tb, -(-batch // 2))       # guarantee >=2 grid steps (v7x: both TCs busy)
        tb = max(8, (tb // 8) * 8)         # sublane-aligned batch tile
    grid = (pl.cdiv(batch, tb),)

    def x_map(i):
        return (i, 0)

    def resident_map(i):
        return (0, 0)

    # Resident (constant index_map) params: optionally single-buffered on v7x.
    w_kwargs = dict(pipeline_mode=pl.Buffered(1)) if single_buffer_weights else {}

    def wspec(shape):
        return pl.BlockSpec(shape, resident_map, **w_kwargs)

    in_specs = [
        pl.BlockSpec((tb, bc), x_map),     # x (batch-tiled, double-buffered)
        wspec(w1.shape), wspec(b1.shape),
        wspec(w2.shape), wspec(b2.shape),
        wspec(w3.shape), wspec(b3.shape),
        wspec(w4.shape), wspec(b4.shape),
        wspec(w_out.shape), wspec(b_out.shape),
    ]
    out_specs = pl.BlockSpec((tb, n_out), x_map)
    out_shape = jax.ShapeDtypeStruct((batch, n_out), jnp.float32)

    combined = pl.pallas_call(
        nbeats_block_kernel,
        out_shape=out_shape,
        grid=grid,
        in_specs=in_specs,
        out_specs=out_specs,
        compiler_params=pltpu.CompilerParams(
            dimension_semantics=("parallel",)),   # v7x megacore sharding; no-op on 1-TC chips
        # vmem_limit_bytes left at default: the demo footprint is KiB-scale.  Set it
        # explicitly (with headroom) for production `units`/`block_batch`.
    )(
        x,
        w1, b1, w2, b2, w3, b3, w4, b4,
        w_out, b_out,
    )

    # 128-aligned split point (bc_pad); padding columns are exactly zero.
    backcast = combined[:, :bc]
    forecast = combined[:, bc_pad:bc_pad + fc]
    return backcast, forecast


def init_params(key, units, theta_dim, backcast_length, forecast_length):
    """Deterministic parameter init. Weights stored as [in, out] (PyTorch W.T)."""
    ks = jax.random.split(key, 8)

    def lin(k, fan_in, fan_out):
        # uniform(-1/sqrt(fan_in), 1/sqrt(fan_in)), like nn.Linear default
        bound = 1.0 / jnp.sqrt(fan_in)
        kw, kb = jax.random.split(k)
        w = jax.random.uniform(kw, (fan_in, fan_out), jnp.float32, -bound, bound)
        b = jax.random.uniform(kb, (1, fan_out), jnp.float32, -bound, bound)
        return w, b

    w1, b1 = lin(ks[0], backcast_length, units)
    w2, b2 = lin(ks[1], units, units)
    w3, b3 = lin(ks[2], units, units)
    w4, b4 = lin(ks[3], units, units)

    bound_u = 1.0 / jnp.sqrt(units)
    w_theta_b = jax.random.uniform(ks[4], (units, theta_dim), jnp.float32, -bound_u, bound_u)
    w_theta_f = jax.random.uniform(ks[5], (units, theta_dim), jnp.float32, -bound_u, bound_u)

    w_backcast, b_backcast = lin(ks[6], theta_dim, backcast_length)
    w_forecast, b_forecast = lin(ks[7], theta_dim, forecast_length)

    return dict(
        w1=w1, b1=b1, w2=w2, b2=b2, w3=w3, b3=b3, w4=w4, b4=b4,
        w_theta_b=w_theta_b, w_theta_f=w_theta_f,
        w_backcast=w_backcast, b_backcast=b_backcast,
        w_forecast=w_forecast, b_forecast=b_forecast,
    )


def nbeats_block_ref(x, p):
    """Pure-JAX f32 reference (unfused, unpadded) for correctness checking."""
    h = jax.nn.relu(x @ p["w1"] + p["b1"])
    h = jax.nn.relu(h @ p["w2"] + p["b2"])
    h = jax.nn.relu(h @ p["w3"] + p["b3"])
    h = jax.nn.relu(h @ p["w4"] + p["b4"])
    theta_b = h @ p["w_theta_b"]
    theta_f = h @ p["w_theta_f"]
    backcast = theta_b @ p["w_backcast"] + p["b_backcast"]
    forecast = theta_f @ p["w_forecast"] + p["b_forecast"]
    return backcast, forecast


if __name__ == "__main__":
    # Small, module-consistent sizes (batch a multiple of 8 for sublane tiling).
    batch = 16
    units = 32
    theta_dim = 8
    backcast_length = 16
    forecast_length = 8

    key = jax.random.PRNGKey(0)
    kx, kp = jax.random.split(key)

    x = jax.random.normal(kx, (batch, backcast_length), jnp.float32)
    params = init_params(kp, units, theta_dim, backcast_length, forecast_length)

    backcast, forecast = nbeats_block(x, params, backcast_length, forecast_length)
    jax.block_until_ready((backcast, forecast))

    # Verify against pure-JAX f32 reference (kernel runs bf16 dots with f32 accumulation,
    # so tolerances are relaxed vs. exact f32).
    bc_ref, fc_ref = nbeats_block_ref(x, params)
    assert backcast.shape == (batch, backcast_length)
    assert forecast.shape == (batch, forecast_length)
    assert jnp.allclose(backcast, bc_ref, atol=2e-2, rtol=2e-2), (
        float(jnp.max(jnp.abs(backcast - bc_ref))))
    assert jnp.allclose(forecast, fc_ref, atol=2e-2, rtol=2e-2), (
        float(jnp.max(jnp.abs(forecast - fc_ref))))

    print("KERNEL_OK")
</pallas_src>

<mosaic_0001>
module attributes {stable_mosaic.version = 11 : i64} {
  func.func @nbeats_block_kernel(%arg0: i32, %arg1: memref<8x16xf32, #tpu.memory_space<vmem>>, %arg2: memref<16x32xbf16, #tpu.memory_space<vmem>>, %arg3: memref<1x32xf32, #tpu.memory_space<vmem>>, %arg4: memref<32x32xbf16, #tpu.memory_space<vmem>>, %arg5: memref<1x32xf32, #tpu.memory_space<vmem>>, %arg6: memref<32x32xbf16, #tpu.memory_space<vmem>>, %arg7: memref<1x32xf32, #tpu.memory_space<vmem>>, %arg8: memref<32x32xbf16, #tpu.memory_space<vmem>>, %arg9: memref<1x32xf32, #tpu.memory_space<vmem>>, %arg10: memref<32x256xbf16, #tpu.memory_space<vmem>>, %arg11: memref<1x256xf32, #tpu.memory_space<vmem>>, %arg12: memref<8x256xf32, #tpu.memory_space<vmem>>) attributes {dimension_semantics = [#tpu.dimension_semantics<parallel>], iteration_bounds = array<i64: 2>, scalar_prefetch = 0 : i64, scratch_operands = 0 : i64, tpu.core_type = #tpu.core_type<tc>, window_params = [{transform_indices = @transform_0, window_bounds = array<i64: 8, 16>}, {pipeline_mode = #tpu.pipeline_mode<synchronous>, transform_indices = @transform_1, window_bounds = array<i64: 16, 32>}, {pipeline_mode = #tpu.pipeline_mode<synchronous>, transform_indices = @transform_2, window_bounds = array<i64: 1, 32>}, {pipeline_mode = #tpu.pipeline_mode<synchronous>, transform_indices = @transform_3, window_bounds = array<i64: 32, 32>}, {pipeline_mode = #tpu.pipeline_mode<synchronous>, transform_indices = @transform_4, window_bounds = array<i64: 1, 32>}, {pipeline_mode = #tpu.pipeline_mode<synchronous>, transform_indices = @transform_5, window_bounds = array<i64: 32, 32>}, {pipeline_mode = #tpu.pipeline_mode<synchronous>, transform_indices = @transform_6, window_bounds = array<i64: 1, 32>}, {pipeline_mode = #tpu.pipeline_mode<synchronous>, transform_indices = @transform_7, window_bounds = array<i64: 32, 32>}, {pipeline_mode = #tpu.pipeline_mode<synchronous>, transform_indices = @transform_8, window_bounds = array<i64: 1, 32>}, {pipeline_mode = #tpu.pipeline_mode<synchronous>, transform_indices = @transform_9, window_bounds = array<i64: 32, 256>}, {pipeline_mode = #tpu.pipeline_mode<synchronous>, transform_indices = @transform_10, window_bounds = array<i64: 1, 256>}, {transform_indices = @transform_11, window_bounds = array<i64: 8, 256>}]} {
    %c0 = arith.constant 0 : index
    %c0_0 = arith.constant 0 : index
    %0 = vector.load %arg1[%c0, %c0_0] : memref<8x16xf32, #tpu.memory_space<vmem>>, vector<8x16xf32>
    %1 = arith.truncf %0 : vector<8x16xf32> to vector<8x16xbf16>
    %c0_1 = arith.constant 0 : index
    %c0_2 = arith.constant 0 : index
    %2 = vector.load %arg2[%c0_1, %c0_2] : memref<16x32xbf16, #tpu.memory_space<vmem>>, vector<16x32xbf16>
    %cst = arith.constant dense<0.000000e+00> : vector<8x32xf32>
    %3 = tpu.matmul %1, %2, %cst {dimension_numbers = #tpu.dot_dimension_numbers<[1], [0], [0], [1], [0, 0, 1, 1], [], []>} : vector<8x16xbf16>, vector<16x32xbf16>, vector<8x32xf32> -> vector<8x32xf32>
    %c0_3 = arith.constant 0 : index
    %c0_4 = arith.constant 0 : index
    %4 = vector.load %arg3[%c0_3, %c0_4] : memref<1x32xf32, #tpu.memory_space<vmem>>, vector<1x32xf32>
    %5 = vector.broadcast %4 : vector<1x32xf32> to vector<8x32xf32>
    %6 = arith.addf %3, %5 : vector<8x32xf32>
    %cst_5 = arith.constant 0.000000e+00 : f32
    %7 = vector.broadcast %cst_5 : f32 to vector<8x32xf32>
    %8 = arith.maximumf %6, %7 : vector<8x32xf32>
    %9 = arith.truncf %8 : vector<8x32xf32> to vector<8x32xbf16>
    %c0_6 = arith.constant 0 : index
    %c0_7 = arith.constant 0 : index
    %10 = vector.load %arg4[%c0_6, %c0_7] : memref<32x32xbf16, #tpu.memory_space<vmem>>, vector<32x32xbf16>
    %cst_8 = arith.constant dense<0.000000e+00> : vector<8x32xf32>
    %11 = tpu.matmul %9, %10, %cst_8 {dimension_numbers = #tpu.dot_dimension_numbers<[1], [0], [0], [1], [0, 0, 1, 1], [], []>} : vector<8x32xbf16>, vector<32x32xbf16>, vector<8x32xf32> -> vector<8x32xf32>
    %c0_9 = arith.constant 0 : index
    %c0_10 = arith.constant 0 : index
    %12 = vector.load %arg5[%c0_9, %c0_10] : memref<1x32xf32, #tpu.memory_space<vmem>>, vector<1x32xf32>
    %13 = vector.broadcast %12 : vector<1x32xf32> to vector<8x32xf32>
    %14 = arith.addf %11, %13 : vector<8x32xf32>
    %cst_11 = arith.constant 0.000000e+00 : f32
    %15 = vector.broadcast %cst_11 : f32 to vector<8x32xf32>
    %16 = arith.maximumf %14, %15 : vector<8x32xf32>
    %17 = arith.truncf %16 : vector<8x32xf32> to vector<8x32xbf16>
    %c0_12 = arith.constant 0 : index
    %c0_13 = arith.constant 0 : index
    %18 = vector.load %arg6[%c0_12, %c0_13] : memref<32x32xbf16, #tpu.memory_space<vmem>>, vector<32x32xbf16>
    %cst_14 = arith.constant dense<0.000000e+00> : vector<8x32xf32>
    %19 = tpu.matmul %17, %18, %cst_14 {dimension_numbers = #tpu.dot_dimension_numbers<[1], [0], [0], [1], [0, 0, 1, 1], [], []>} : vector<8x32xbf16>, vector<32x32xbf16>, vector<8x32xf32> -> vector<8x32xf32>
    %c0_15 = arith.constant 0 : index
    %c0_16 = arith.constant 0 : index
    %20 = vector.load %arg7[%c0_15, %c0_16] : memref<1x32xf32, #tpu.memory_space<vmem>>, vector<1x32xf32>
    %21 = vector.broadcast %20 : vector<1x32xf32> to vector<8x32xf32>
    %22 = arith.addf %19, %21 : vector<8x32xf32>
    %cst_17 = arith.constant 0.000000e+00 : f32
    %23 = vector.broadcast %cst_17 : f32 to vector<8x32xf32>
    %24 = arith.maximumf %22, %23 : vector<8x32xf32>
    %25 = arith.truncf %24 : vector<8x32xf32> to vector<8x32xbf16>
    %c0_18 = arith.constant 0 : index
    %c0_19 = arith.constant 0 : index
    %26 = vector.load %arg8[%c0_18, %c0_19] : memref<32x32xbf16, #tpu.memory_space<vmem>>, vector<32x32xbf16>
    %cst_20 = arith.constant dense<0.000000e+00> : vector<8x32xf32>
    %27 = tpu.matmul %25, %26, %cst_20 {dimension_numbers = #tpu.dot_dimension_numbers<[1], [0], [0], [1], [0, 0, 1, 1], [], []>} : vector<8x32xbf16>, vector<32x32xbf16>, vector<8x32xf32> -> vector<8x32xf32>
    %c0_21 = arith.constant 0 : index
    %c0_22 = arith.constant 0 : index
    %28 = vector.load %arg9[%c0_21, %c0_22] : memref<1x32xf32, #tpu.memory_space<vmem>>, vector<1x32xf32>
    %29 = vector.broadcast %28 : vector<1x32xf32> to vector<8x32xf32>
    %30 = arith.addf %27, %29 : vector<8x32xf32>
    %cst_23 = arith.constant 0.000000e+00 : f32
    %31 = vector.broadcast %cst_23 : f32 to vector<8x32xf32>
    %32 = arith.maximumf %30, %31 : vector<8x32xf32>
    %33 = arith.truncf %32 : vector<8x32xf32> to vector<8x32xbf16>
    %c0_24 = arith.constant 0 : index
    %c0_25 = arith.constant 0 : index
    %34 = vector.load %arg10[%c0_24, %c0_25] : memref<32x256xbf16, #tpu.memory_space<vmem>>, vector<32x256xbf16>
    %cst_26 = arith.constant dense<0.000000e+00> : vector<8x256xf32>
    %35 = tpu.matmul %33, %34, %cst_26 {dimension_numbers = #tpu.dot_dimension_numbers<[1], [0], [0], [1], [0, 0, 1, 1], [], []>} : vector<8x32xbf16>, vector<32x256xbf16>, vector<8x256xf32> -> vector<8x256xf32>
    %c0_27 = arith.constant 0 : index
    %c0_28 = arith.constant 0 : index
    %36 = vector.load %arg11[%c0_27, %c0_28] : memref<1x256xf32, #tpu.memory_space<vmem>>, vector<1x256xf32>
    %37 = vector.broadcast %36 : vector<1x256xf32> to vector<8x256xf32>
    %38 = arith.addf %35, %37 : vector<8x256xf32>
    %c0_29 = arith.constant 0 : index
    %c0_30 = arith.constant 0 : index
    %39 = vector.load %arg12[%c0_29, %c0_30] : memref<8x256xf32, #tpu.memory_space<vmem>>, vector<8x256xf32>
    tpu.vector_store %arg12[%c0_29, %c0_30], %38 {strides = array<i32>} : memref<8x256xf32, #tpu.memory_space<vmem>>, vector<8x256xf32>,
    return
  }
  func.func @transform_0(%arg0: i32) -> (i32, i32) {
    %c0_i32 = arith.constant 0 : i32
    %c0_i32_0 = arith.constant 0 : i32
    return %arg0, %c0_i32 : i32, i32
  }
  func.func @transform_1(%arg0: i32) -> (i32, i32) {
    %c0_i32 = arith.constant 0 : i32
    %c0_i32_0 = arith.constant 0 : i32
    %c0_i32_1 = arith.constant 0 : i32
    return %c0_i32, %c0_i32_0 : i32, i32
  }
  func.func @transform_2(%arg0: i32) -> (i32, i32) {
    %c0_i32 = arith.constant 0 : i32
    %c0_i32_0 = arith.constant 0 : i32
    %c0_i32_1 = arith.constant 0 : i32
    return %c0_i32, %c0_i32_0 : i32, i32
  }
  func.func @transform_3(%arg0: i32) -> (i32, i32) {
    %c0_i32 = arith.constant 0 : i32
    %c0_i32_0 = arith.constant 0 : i32
    %c0_i32_1 = arith.constant 0 : i32
    return %c0_i32, %c0_i32_0 : i32, i32
  }
  func.func @transform_4(%arg0: i32) -> (i32, i32) {
    %c0_i32 = arith.constant 0 : i32
    %c0_i32_0 = arith.constant 0 : i32
    %c0_i32_1 = arith.constant 0 : i32
    return %c0_i32, %c0_i32_0 : i32, i32
  }
  func.func @transform_5(%arg0: i32) -> (i32, i32) {
    %c0_i32 = arith.constant 0 : i32
    %c0_i32_0 = arith.constant 0 : i32
    %c0_i32_1 = arith.constant 0 : i32
    return %c0_i32, %c0_i32_0 : i32, i32
  }
  func.func @transform_6(%arg0: i32) -> (i32, i32) {
    %c0_i32 = arith.constant 0 : i32
    %c0_i32_0 = arith.constant 0 : i32
    %c0_i32_1 = arith.constant 0 : i32
    return %c0_i32, %c0_i32_0 : i32, i32
  }
  func.func @transform_7(%arg0: i32) -> (i32, i32) {
    %c0_i32 = arith.constant 0 : i32
    %c0_i32_0 = arith.constant 0 : i32
    %c0_i32_1 = arith.constant 0 : i32
    return %c0_i32, %c0_i32_0 : i32, i32
  }
  func.func @transform_8(%arg0: i32) -> (i32, i32) {
    %c0_i32 = arith.constant 0 : i32
    %c0_i32_0 = arith.constant 0 : i32
    %c0_i32_1 = arith.constant 0 : i32
    return %c0_i32, %c0_i32_0 : i32, i32
  }
  func.func @transform_9(%arg0: i32) -> (i32, i32) {
    %c0_i32 = arith.constant 0 : i32
    %c0_i32_0 = arith.constant 0 : i32
    %c0_i32_1 = arith.constant 0 : i32
    return %c0_i32, %c0_i32_0 : i32, i32
  }
  func.func @transform_10(%arg0: i32) -> (i32, i32) {
    %c0_i32 = arith.constant 0 : i32
    %c0_i32_0 = arith.constant 0 : i32
    %c0_i32_1 = arith.constant 0 : i32
    return %c0_i32, %c0_i32_0 : i32, i32
  }
  func.func @transform_11(%arg0: i32) -> (i32, i32) {
    %c0_i32 = arith.constant 0 : i32
    %c0_i32_0 = arith.constant 0 : i32
    return %arg0, %c0_i32 : i32, i32
  }
}

</mosaic_0001>

<llo_original>
// kernel: tpu_custom_call.1
$region0: #{tpu_custom_call.1}
  #allocation0 [shape = 'u32[]', space=smem, size = 0x4, offset = 0x4, fixed_abs, tag = 'smem constant byte address 0x4 - core index']
  #allocation1 [shape = 'u32[72,128]{1,0:T(1,128)}', space=vmem, size = 0x9000, scoped, tag = 'internal scratch']
  %s0 = inlined_call_operand.hbm [shape: f32[16,16], index: 0, kind: input, shape index: {}]
  %s1 = inlined_call_operand.hbm [shape: bf16[16,32], index: 1, kind: input, shape index: {}]
  %s2 = inlined_call_operand.vmem [shape: f32[1,32], index: 2, kind: input, shape index: {}]
  %s3 = inlined_call_operand.hbm [shape: bf16[32,32], index: 3, kind: input, shape index: {}]
  %s4 = inlined_call_operand.hbm [shape: f32[1,32], index: 4, kind: input, shape index: {}]
  %s5 = inlined_call_operand.hbm [shape: bf16[32,32], index: 5, kind: input, shape index: {}]
  %s6 = inlined_call_operand.vmem [shape: f32[1,32], index: 6, kind: input, shape index: {}]
  %s7 = inlined_call_operand.hbm [shape: bf16[32,32], index: 7, kind: input, shape index: {}]
  %s8 = inlined_call_operand.vmem [shape: f32[1,32], index: 8, kind: input, shape index: {}]
  %s9 = inlined_call_operand.hbm [shape: bf16[32,256], index: 9, kind: input, shape index: {}]
  %s10 = inlined_call_operand.vmem [shape: f32[1,256], index: 10, kind: input, shape index: {}]
  %s11 = inlined_call_operand.hbm [shape: f32[16,256], index: 11, kind: output, shape index: {}]
  %s12 = sld [smem:[#allocation0]]
  $region105: #{tpu_custom_call.1} parent=0
    _
  %s14 = ssub.s32 1, %s12
  %s15 = scalar_select 0, %s14, %s12
  $region1: #{tpu_custom_call.1} parent=0
    #allocation2 [shape = 'u8[8192]{0}', space=vmem, size = 0x2000, scoped, tag = 'input window, operand 0']
    #allocation3 [shape = 's32[2]{0}', space=sflag, size = 0x8, scoped, tag = 'scoped memory for tpu_custom_call.1']
    #allocation4 [shape = 's32[2]{0}', space=sflag, size = 0x8, scoped, tag = 'scoped memory for tpu_custom_call.1']
    #allocation5 [shape = 'u8[4096]{0}', space=vmem, size = 0x1000, scoped, tag = 'input window, operand 1, single buffered']
    #allocation6 [shape = 's32[1]{0}', space=sflag, size = 0x4, scoped, tag = 'scoped memory for tpu_custom_call.1']
    #allocation7 [shape = 'u8[8192]{0}', space=vmem, size = 0x2000, scoped, tag = 'input window, operand 3, single buffered']
    #allocation8 [shape = 'u8[512]{0}', space=vmem, size = 0x400, scoped, tag = 'input window, operand 4, single buffered']
    #allocation9 [shape = 's32[1]{0}', space=sflag, size = 0x4, scoped, tag = 'scoped memory for tpu_custom_call.1']
    #allocation10 [shape = 'u8[8192]{0}', space=vmem, size = 0x2000, scoped, tag = 'input window, operand 5, single buffered']
    #allocation11 [shape = 'u8[8192]{0}', space=vmem, size = 0x2000, scoped, tag = 'input window, operand 7, single buffered']
    #allocation12 [shape = 's32[1]{0}', space=sflag, size = 0x4, scoped, tag = 'scoped memory for tpu_custom_call.1']
    #allocation13 [shape = 'u8[16384]{0}', space=vmem, size = 0x4000, scoped, tag = 'input window, operand 9, single buffered']
    #allocation14 [shape = 'u8[16384]{0}', space=vmem, size = 0x4000, scoped, tag = 'output window, operand 0']
    %16 = vsyncpa [#allocation3], 0
    %s17 = scalar_lea.sflag [#allocation3], 1
    %18 = vsyncpa %s17, 0
    %19 = vsyncpa [#allocation6], 0
    %20 = vsyncpa [#allocation9], 0
    %21 = vsyncpa [#allocation12], 0
    %22 = vsyncpa [#allocation4], 0
    %s23 = scalar_lea.sflag [#allocation4], 1
    %24 = vsyncpa %s23, 0
    loop: start=0, step=1, limit=4
    $region2: #{tpu_custom_call.1} parent=1 // loop_pre_header
      _
    $region3: #{tpu_custom_call.1} parent=1 // loop_header
      %s26 = sphi 0, %s30
      %p27 = scmp.ge.s32.totalorder %s26, 4
      %s36 = sphi 0, %s38
      %s39 = sphi 0, %s36
      %s40 = sphi 0, %s39
      %s56 = sphi 0, %s40
      %s60 = sphi 0, %s60
      %s62 = sphi 0, %s60
      %s63 = sphi 0, %s62
      %s77 = sphi 0, %s63
      %s81 = sphi 0, %s81
      %s83 = sphi 0, %s81
      %s84 = sphi 0, %s83
      %s98 = sphi 0, %s84
      %s102 = sphi 0, %s102
      %s104 = sphi 0, %s102
      %s105 = sphi 0, %s104
      %s119 = sphi 0, %s105
      %s123 = sphi 0, %s123
      %s125 = sphi 0, %s123
      %s126 = sphi 0, %s125
      %s140 = sphi 0, %s126
      %s144 = sphi 0, %s144
      %s146 = sphi 0, %s144
      %s147 = sphi 0, %s146
      %s161 = sphi 0, %s147
      %s165 = sphi 0, %s165
      %s167 = sphi 0, %s165
      %s168 = sphi 0, %s167
      %s182 = sphi 0, %s168
      %s186 = sphi 0, %s186
      %s188 = sphi 0, %s186
      %s189 = sphi 0, %s188
      %s203 = sphi 0, %s189
      %s207 = sphi 0, %s207
      %s209 = sphi 0, %s207
      %s210 = sphi 0, %s209
      %s224 = sphi 0, %s210
      %s228 = sphi 0, %s228
      %s230 = sphi 0, %s228
      %s231 = sphi 0, %s230
      %s245 = sphi 0, %s231
      %s249 = sphi 0, %s249
      %s251 = sphi 0, %s249
      %s252 = sphi 0, %s251
      %s266 = sphi 0, %s252
      %s272 = sphi 0, %s274
      %s275 = sphi 0, %s272
      %s276 = sphi 0, %s275
      %s292 = sphi 0, %s276
    $region4: #{tpu_custom_call.1} parent=1 // loop_header_branch
      %29 = sbr.rel (%p27) target = $region8
    $region5: #{tpu_custom_call.1} parent=1 // loop_body
      %s31 = ssub.s32 %s26, 1
      %s32 = ssub.s32 %s26, 2
      %s33 = sadd.s32 %s26, 1
      %s34 = ssub.s32 %s26, %s33
      %p35 = scmp.eq.s32.totalorder %s34, 0
      %s37 = sadd.s32 %s36, 1
      %s38 = scalar_select %p35, %s36, %s37
      %p41 = pneg %p35
      %p42 = scmp.eq.s32.totalorder %s26, 1
      %p43 = por %p41, %p42
      %p44 = scmp.ne.s32.totalorder %s36, %s39
      %p45 = scmp.eq.s32.totalorder %s26, 0
      %p46 = por %p44, %p45
      %p47 = scmp.ne.s32.totalorder %s36, %s39
      %p48 = scmp.eq.s32.totalorder %s31, 1
      %p49 = por %p47, %p48
      %p50 = scmp.ne.s32.totalorder %s39, %s40
      %p51 = scmp.eq.s32.totalorder %s31, 0
      %p52 = por %p50, %p51
      %p53 = scmp.ne.s32.totalorder %s39, %s40
      %p54 = scmp.eq.s32.totalorder %s32, 1
      %p55 = por %p53, %p54
      %p57 = scmp.ne.s32.totalorder %s40, %s56
      %p58 = scmp.eq.s32.totalorder %s32, 0
      %p59 = por %p57, %p58
      %s61 = sadd.s32 %s60, 1
      %p64 = scmp.eq.s32.totalorder %s26, 1
      %p65 = scmp.ne.s32.totalorder %s60, %s62
      %p66 = scmp.eq.s32.totalorder %s26, 0
      %p67 = por %p65, %p66
      %p68 = scmp.ne.s32.totalorder %s60, %s62
      %p69 = scmp.eq.s32.totalorder %s31, 1
      %p70 = por %p68, %p69
      %p71 = scmp.ne.s32.totalorder %s62, %s63
      %p72 = scmp.eq.s32.totalorder %s31, 0
      %p73 = por %p71, %p72
      %p74 = scmp.ne.s32.totalorder %s62, %s63
      %p75 = scmp.eq.s32.totalorder %s32, 1
      %p76 = por %p74, %p75
      %p78 = scmp.ne.s32.totalorder %s63, %s77
      %p79 = scmp.eq.s32.totalorder %s32, 0
      %p80 = por %p78, %p79
      %s82 = sadd.s32 %s81, 1
      %p85 = scmp.eq.s32.totalorder %s26, 1
      %p86 = scmp.ne.s32.totalorder %s81, %s83
      %p87 = scmp.eq.s32.totalorder %s26, 0
      %p88 = por %p86, %p87
      %p89 = scmp.ne.s32.totalorder %s81, %s83
      %p90 = scmp.eq.s32.totalorder %s31, 1
      %p91 = por %p89, %p90
      %p92 = scmp.ne.s32.totalorder %s83, %s84
      %p93 = scmp.eq.s32.totalorder %s31, 0
      %p94 = por %p92, %p93
      %p95 = scmp.ne.s32.totalorder %s83, %s84
      %p96 = scmp.eq.s32.totalorder %s32, 1
      %p97 = por %p95, %p96
      %p99 = scmp.ne.s32.totalorder %s84, %s98
      %p100 = scmp.eq.s32.totalorder %s32, 0
      %p101 = por %p99, %p100
      %s103 = sadd.s32 %s102, 1
      %p106 = scmp.eq.s32.totalorder %s26, 1
      %p107 = scmp.ne.s32.totalorder %s102, %s104
      %p108 = scmp.eq.s32.totalorder %s26, 0
      %p109 = por %p107, %p108
      %p110 = scmp.ne.s32.totalorder %s102, %s104
      %p111 = scmp.eq.s32.totalorder %s31, 1
      %p112 = por %p110, %p111
      %p113 = scmp.ne.s32.totalorder %s104, %s105
      %p114 = scmp.eq.s32.totalorder %s31, 0
      %p115 = por %p113, %p114
      %p116 = scmp.ne.s32.totalorder %s104, %s105
      %p117 = scmp.eq.s32.totalorder %s32, 1
      %p118 = por %p116, %p117
      %p120 = scmp.ne.s32.totalorder %s105, %s119
      %p121 = scmp.eq.s32.totalorder %s32, 0
      %p122 = por %p120, %p121
      %s124 = sadd.s32 %s123, 1
      %p127 = scmp.eq.s32.totalorder %s26, 1
      %p128 = scmp.ne.s32.totalorder %s123, %s125
      %p129 = scmp.eq.s32.totalorder %s26, 0
      %p130 = por %p128, %p129
      %p131 = scmp.ne.s32.totalorder %s123, %s125
      %p132 = scmp.eq.s32.totalorder %s31, 1
      %p133 = por %p131, %p132
      %p134 = scmp.ne.s32.totalorder %s125, %s126
      %p135 = scmp.eq.s32.totalorder %s31, 0
      %p136 = por %p134, %p135
      %p137 = scmp.ne.s32.totalorder %s125, %s126
      %p138 = scmp.eq.s32.totalorder %s32, 1
      %p139 = por %p137, %p138
      %p141 = scmp.ne.s32.totalorder %s126, %s140
      %p142 = scmp.eq.s32.totalorder %s32, 0
      %p143 = por %p141, %p142
      %s145 = sadd.s32 %s144, 1
      %p148 = scmp.eq.s32.totalorder %s26, 1
      %p149 = scmp.ne.s32.totalorder %s144, %s146
      %p150 = scmp.eq.s32.totalorder %s26, 0
      %p151 = por %p149, %p150
      %p152 = scmp.ne.s32.totalorder %s144, %s146
      %p153 = scmp.eq.s32.totalorder %s31, 1
      %p154 = por %p152, %p153
      %p155 = scmp.ne.s32.totalorder %s146, %s147
      %p156 = scmp.eq.s32.totalorder %s31, 0
      %p157 = por %p155, %p156
      %p158 = scmp.ne.s32.totalorder %s146, %s147
      %p159 = scmp.eq.s32.totalorder %s32, 1
      %p160 = por %p158, %p159
      %p162 = scmp.ne.s32.totalorder %s147, %s161
      %p163 = scmp.eq.s32.totalorder %s32, 0
      %p164 = por %p162, %p163
      %s166 = sadd.s32 %s165, 1
      %p169 = scmp.eq.s32.totalorder %s26, 1
      %p170 = scmp.ne.s32.totalorder %s165, %s167
      %p171 = scmp.eq.s32.totalorder %s26, 0
      %p172 = por %p170, %p171
      %p173 = scmp.ne.s32.totalorder %s165, %s167
      %p174 = scmp.eq.s32.totalorder %s31, 1
      %p175 = por %p173, %p174
      %p176 = scmp.ne.s32.totalorder %s167, %s168
      %p177 = scmp.eq.s32.totalorder %s31, 0
      %p178 = por %p176, %p177
      %p179 = scmp.ne.s32.totalorder %s167, %s168
      %p180 = scmp.eq.s32.totalorder %s32, 1
      %p181 = por %p179, %p180
      %p183 = scmp.ne.s32.totalorder %s168, %s182
      %p184 = scmp.eq.s32.totalorder %s32, 0
      %p185 = por %p183, %p184
      %s187 = sadd.s32 %s186, 1
      %p190 = scmp.eq.s32.totalorder %s26, 1
      %p191 = scmp.ne.s32.totalorder %s186, %s188
      %p192 = scmp.eq.s32.totalorder %s26, 0
      %p193 = por %p191, %p192
      %p194 = scmp.ne.s32.totalorder %s186, %s188
      %p195 = scmp.eq.s32.totalorder %s31, 1
      %p196 = por %p194, %p195
      %p197 = scmp.ne.s32.totalorder %s188, %s189
      %p198 = scmp.eq.s32.totalorder %s31, 0
      %p199 = por %p197, %p198
      %p200 = scmp.ne.s32.totalorder %s188, %s189
      %p201 = scmp.eq.s32.totalorder %s32, 1
      %p202 = por %p200, %p201
      %p204 = scmp.ne.s32.totalorder %s189, %s203
      %p205 = scmp.eq.s32.totalorder %s32, 0
      %p206 = por %p204, %p205
      %s208 = sadd.s32 %s207, 1
      %p211 = scmp.eq.s32.totalorder %s26, 1
      %p212 = scmp.ne.s32.totalorder %s207, %s209
      %p213 = scmp.eq.s32.totalorder %s26, 0
      %p214 = por %p212, %p213
      %p215 = scmp.ne.s32.totalorder %s207, %s209
      %p216 = scmp.eq.s32.totalorder %s31, 1
      %p217 = por %p215, %p216
      %p218 = scmp.ne.s32.totalorder %s209, %s210
      %p219 = scmp.eq.s32.totalorder %s31, 0
      %p220 = por %p218, %p219
      %p221 = scmp.ne.s32.totalorder %s209, %s210
      %p222 = scmp.eq.s32.totalorder %s32, 1
      %p223 = por %p221, %p222
      %p225 = scmp.ne.s32.totalorder %s210, %s224
      %p226 = scmp.eq.s32.totalorder %s32, 0
      %p227 = por %p225, %p226
      %s229 = sadd.s32 %s228, 1
      %p232 = scmp.eq.s32.totalorder %s26, 1
      %p233 = scmp.ne.s32.totalorder %s228, %s230
      %p234 = scmp.eq.s32.totalorder %s26, 0
      %p235 = por %p233, %p234
      %p236 = scmp.ne.s32.totalorder %s228, %s230
      %p237 = scmp.eq.s32.totalorder %s31, 1
      %p238 = por %p236, %p237
      %p239 = scmp.ne.s32.totalorder %s230, %s231
      %p240 = scmp.eq.s32.totalorder %s31, 0
      %p241 = por %p239, %p240
      %p242 = scmp.ne.s32.totalorder %s230, %s231
      %p243 = scmp.eq.s32.totalorder %s32, 1
      %p244 = por %p242, %p243
      %p246 = scmp.ne.s32.totalorder %s231, %s245
      %p247 = scmp.eq.s32.totalorder %s32, 0
      %p248 = por %p246, %p247
      %s250 = sadd.s32 %s249, 1
      %p253 = scmp.eq.s32.totalorder %s26, 1
      %p254 = scmp.ne.s32.totalorder %s249, %s251
      %p255 = scmp.eq.s32.totalorder %s26, 0
      %p256 = por %p254, %p255
      %p257 = scmp.ne.s32.totalorder %s249, %s251
      %p258 = scmp.eq.s32.totalorder %s31, 1
      %p259 = por %p257, %p258
      %p260 = scmp.ne.s32.totalorder %s251, %s252
      %p261 = scmp.eq.s32.totalorder %s31, 0
      %p262 = por %p260, %p261
      %p263 = scmp.ne.s32.totalorder %s251, %s252
      %p264 = scmp.eq.s32.totalorder %s32, 1
      %p265 = por %p263, %p264
      %p267 = scmp.ne.s32.totalorder %s252, %s266
      %p268 = scmp.eq.s32.totalorder %s32, 0
      %p269 = por %p267, %p268
      %s270 = ssub.s32 %s26, %s33
      %p271 = scmp.eq.s32.totalorder %s270, 0
      %s273 = sadd.s32 %s272, 1
      %s274 = scalar_select %p271, %s272, %s273
      %p277 = pneg %p271
      %p278 = scmp.eq.s32.totalorder %s26, 1
      %p279 = por %p277, %p278
      %p280 = scmp.ne.s32.totalorder %s272, %s275
      %p281 = scmp.eq.s32.totalorder %s26, 0
      %p282 = por %p280, %p281
      %p283 = scmp.ne.s32.totalorder %s272, %s275
      %p284 = scmp.eq.s32.totalorder %s31, 1
      %p285 = por %p283, %p284
      %p286 = scmp.ne.s32.totalorder %s275, %s276
      %p287 = scmp.eq.s32.totalorder %s31, 0
      %p288 = por %p286, %p287
      %p289 = scmp.ne.s32.totalorder %s275, %s276
      %p290 = scmp.eq.s32.totalorder %s32, 1
      %p291 = por %p289, %p290
      %p293 = scmp.ne.s32.totalorder %s276, %s292
      %p294 = scmp.eq.s32.totalorder %s32, 0
      %p295 = por %p293, %p294
      %p296 = scmp.le.s32.totalorder 1, %s26
      %p297 = scmp.lt.s32.totalorder %s26, 3
      %p298 = pnand %p296, %p297
      %p299 = pneg %p298
      // Predicated region
      $region9: #{tpu_custom_call.1} parent=5 // pred_check
        _
      $region10: #{tpu_custom_call.1} parent=5 // pred_check_branch
        %301 = sbr.rel (%p298) target = $region12
      $region11: #{tpu_custom_call.1} parent=5 // pred_region
        %s302 = ssub.s32 %s26, 1
        // Predicated region
        $region13: #{tpu_custom_call.1} parent=11 // pred_check
          %p303 = pneg %p73
        $region14: #{tpu_custom_call.1} parent=11 // pred_check_branch
          %305 = sbr.rel (%p303) target = $region16
        $region15: #{tpu_custom_call.1} parent=11 // pred_region
          %307 = vsyncadd [#allocation6], 0
          %s308 = sshll.u32 %s1, 4
          %s309 = int_to_ptr.hbm [resolvable:$true] %s308
          %s310 = sshll.u32 [#allocation5], 4
          %s311 = int_to_ptr.vmem [resolvable:$true] %s310
          %316 = dma.hbm_to_vmem [thread:$0]  %s309, 128, %s311, [#allocation6], 64, 64, 4
        $region16: #{tpu_custom_call.1} parent=11 // pred_fallthru
          _
        // Predicated region
        $region17: #{tpu_custom_call.1} parent=11 // pred_check
          %p317 = pneg %p94
        $region18: #{tpu_custom_call.1} parent=11 // pred_check_branch
          %319 = sbr.rel (%p317) target = $region20
        $region19: #{tpu_custom_call.1} parent=11 // pred_region
          _
        $region20: #{tpu_custom_call.1} parent=11 // pred_fallthru
          _
        // Predicated region
        $region21: #{tpu_custom_call.1} parent=11 // pred_check
          %p320 = pneg %p115
        $region22: #{tpu_custom_call.1} parent=11 // pred_check_branch
          %322 = sbr.rel (%p320) target = $region24
        $region23: #{tpu_custom_call.1} parent=11 // pred_region
          %324 = vsyncadd [#allocation6], 0
          %s325 = sshll.u32 %s3, 4
          %s326 = int_to_ptr.hbm [resolvable:$true] %s325
          %s327 = sshll.u32 [#allocation7], 4
          %s328 = int_to_ptr.vmem [resolvable:$true] %s327
          %333 = dma.hbm_to_vmem [thread:$0]  %s326, 256, %s328, [#allocation6], 64, 64, 4
        $region24: #{tpu_custom_call.1} parent=11 // pred_fallthru
          _
        // Predicated region
        $region25: #{tpu_custom_call.1} parent=11 // pred_check
          %p334 = pneg %p136
        $region26: #{tpu_custom_call.1} parent=11 // pred_check_branch
          %336 = sbr.rel (%p334) target = $region28
        $region27: #{tpu_custom_call.1} parent=11 // pred_region
          %338 = vsyncadd [#allocation9], 0
          %s340 = sshll.u32 %s4, 4
          %s341 = int_to_ptr.hbm [resolvable:$true] %s340
          %s342 = sshll.u32 [#allocation8], 4
          %s343 = int_to_ptr.vmem [resolvable:$true] %s342
          %345 = dma.hbm_to_vmem [thread:$0]  %s341, 16, %s343, [#allocation9]
        $region28: #{tpu_custom_call.1} parent=11 // pred_fallthru
          _
        // Predicated region
        $region29: #{tpu_custom_call.1} parent=11 // pred_check
          %p346 = pneg %p157
        $region30: #{tpu_custom_call.1} parent=11 // pred_check_branch
          %348 = sbr.rel (%p346) target = $region32
        $region31: #{tpu_custom_call.1} parent=11 // pred_region
          %350 = vsyncadd [#allocation9], 0
          %s351 = sshll.u32 %s5, 4
          %s352 = int_to_ptr.hbm [resolvable:$true] %s351
          %s353 = sshll.u32 [#allocation10], 4
          %s354 = int_to_ptr.vmem [resolvable:$true] %s353
          %359 = dma.hbm_to_vmem [thread:$0]  %s352, 256, %s354, [#allocation9], 64, 64, 4
        $region32: #{tpu_custom_call.1} parent=11 // pred_fallthru
          _
        // Predicated region
        $region33: #{tpu_custom_call.1} parent=11 // pred_check
          %p360 = pneg %p178
        $region34: #{tpu_custom_call.1} parent=11 // pred_check_branch
          %362 = sbr.rel (%p360) target = $region36
        $region35: #{tpu_custom_call.1} parent=11 // pred_region
          _
        $region36: #{tpu_custom_call.1} parent=11 // pred_fallthru
          _
        // Predicated region
        $region37: #{tpu_custom_call.1} parent=11 // pred_check
          %p363 = pneg %p199
        $region38: #{tpu_custom_call.1} parent=11 // pred_check_branch
          %365 = sbr.rel (%p363) target = $region40
        $region39: #{tpu_custom_call.1} parent=11 // pred_region
          %367 = vsyncadd [#allocation12], 0
          %s368 = sshll.u32 %s7, 4
          %s369 = int_to_ptr.hbm [resolvable:$true] %s368
          %s370 = sshll.u32 [#allocation11], 4
          %s371 = int_to_ptr.vmem [resolvable:$true] %s370
          %376 = dma.hbm_to_vmem [thread:$0]  %s369, 256, %s371, [#allocation12], 64, 64, 4
        $region40: #{tpu_custom_call.1} parent=11 // pred_fallthru
          _
        // Predicated region
        $region41: #{tpu_custom_call.1} parent=11 // pred_check
          %p377 = pneg %p220
        $region42: #{tpu_custom_call.1} parent=11 // pred_check_branch
          %379 = sbr.rel (%p377) target = $region44
        $region43: #{tpu_custom_call.1} parent=11 // pred_region
          _
        $region44: #{tpu_custom_call.1} parent=11 // pred_fallthru
          _
        // Predicated region
        $region45: #{tpu_custom_call.1} parent=11 // pred_check
          %p380 = pneg %p241
        $region46: #{tpu_custom_call.1} parent=11 // pred_check_branch
          %382 = sbr.rel (%p380) target = $region48
        $region47: #{tpu_custom_call.1} parent=11 // pred_region
          %384 = vsyncadd [#allocation12], 0
          %s385 = sshll.u32 %s9, 4
          %s386 = int_to_ptr.hbm [resolvable:$true] %s385
          %s387 = sshll.u32 [#allocation13], 4
          %s388 = int_to_ptr.vmem [resolvable:$true] %s387
          %393 = dma.hbm_to_vmem [thread:$0]  %s386, 512, %s388, [#allocation12], 128, 128, 8
        $region48: #{tpu_custom_call.1} parent=11 // pred_fallthru
          _
        // Predicated region
        $region49: #{tpu_custom_call.1} parent=11 // pred_check
          %p394 = pneg %p262
        $region50: #{tpu_custom_call.1} parent=11 // pred_check_branch
          %396 = sbr.rel (%p394) target = $region52
        $region51: #{tpu_custom_call.1} parent=11 // pred_region
          _
        $region52: #{tpu_custom_call.1} parent=11 // pred_fallthru
          _
      $region12: #{tpu_custom_call.1} parent=5 // pred_fallthru
        _
      %p397 = scmp.lt.s32.totalorder %s26, 2
      // Predicated region
      $region53: #{tpu_custom_call.1} parent=5 // pred_check
        %p398 = pneg %p397
      $region54: #{tpu_custom_call.1} parent=5 // pred_check_branch
        %400 = sbr.rel (%p398) target = $region56
      $region55: #{tpu_custom_call.1} parent=5 // pred_region
        // Predicated region
        $region57: #{tpu_custom_call.1} parent=55 // pred_check
          %p401 = pneg %p46
        $region58: #{tpu_custom_call.1} parent=55 // pred_check_branch
          %403 = sbr.rel (%p401) target = $region60
        $region59: #{tpu_custom_call.1} parent=55 // pred_region
          %s404 = sand.u32 %s36, 1
          %s405 = scalar_lea.sflag [#allocation3], %s404
          %s406 = sand.u32 %s36, 1
          %s407 = smul.addr %s406, 8
          %s408 = scalar_lea.vmem [#allocation2], %s407
          %410 = vsyncadd %s405, 0
          %s411 = smul.addr %s26, 8
          %s412 = scalar_lea.hbm %s0, %s411
          %s414 = sshll.u32 %s412, 4
          %s415 = int_to_ptr.hbm [resolvable:$true] %s414
          %s416 = sshll.u32 %s408, 4
          %s417 = int_to_ptr.vmem [resolvable:$true] %s416
          %419 = dma.hbm_to_vmem [thread:$0]  %s415, 128, %s417, %s405
        $region60: #{tpu_custom_call.1} parent=55 // pred_fallthru
          _
      $region56: #{tpu_custom_call.1} parent=5 // pred_fallthru
        _
      %p420 = scmp.le.s32.totalorder 1, %s26
      %p421 = scmp.lt.s32.totalorder %s26, 3
      %p422 = pnand %p420, %p421
      %p423 = pneg %p422
      // Predicated region
      $region61: #{tpu_custom_call.1} parent=5 // pred_check
        _
      $region62: #{tpu_custom_call.1} parent=5 // pred_check_branch
        %425 = sbr.rel (%p422) target = $region64
      $region63: #{tpu_custom_call.1} parent=5 // pred_region
        %s426 = ssub.s32 %s26, 1
        %s427 = sand.u32 %s39, 1
        %s428 = scalar_lea.sflag [#allocation3], %s427
        %s429 = sand.u32 %s39, 1
        %s430 = smul.addr %s429, 8
        %s431 = scalar_lea.vmem [#allocation2], %s430
        // Predicated region
        $region65: #{tpu_custom_call.1} parent=63 // pred_check
          %p432 = pneg %p52
        $region66: #{tpu_custom_call.1} parent=63 // pred_check_branch
          %434 = sbr.rel (%p432) target = $region68
        $region67: #{tpu_custom_call.1} parent=63 // pred_region
          %436 = dma.done %s428, 128
        $region68: #{tpu_custom_call.1} parent=63 // pred_fallthru
          _
        // Predicated region
        $region69: #{tpu_custom_call.1} parent=63 // pred_check
          %p437 = pneg %p73
        $region70: #{tpu_custom_call.1} parent=63 // pred_check_branch
          %439 = sbr.rel (%p437) target = $region72
        $region71: #{tpu_custom_call.1} parent=63 // pred_region
          %441 = dma.done [#allocation6], 128
        $region72: #{tpu_custom_call.1} parent=63 // pred_fallthru
          _
        // Predicated region
        $region73: #{tpu_custom_call.1} parent=63 // pred_check
          %p442 = pneg %p115
        $region74: #{tpu_custom_call.1} parent=63 // pred_check_branch
          %444 = sbr.rel (%p442) target = $region76
        $region75: #{tpu_custom_call.1} parent=63 // pred_region
          %446 = dma.done [#allocation6], 256
        $region76: #{tpu_custom_call.1} parent=63 // pred_fallthru
          _
        // Predicated region
        $region77: #{tpu_custom_call.1} parent=63 // pred_check
          %p447 = pneg %p136
        $region78: #{tpu_custom_call.1} parent=63 // pred_check_branch
          %449 = sbr.rel (%p447) target = $region80
        $region79: #{tpu_custom_call.1} parent=63 // pred_region
          %451 = dma.done [#allocation9], 16
        $region80: #{tpu_custom_call.1} parent=63 // pred_fallthru
          _
        // Predicated region
        $region81: #{tpu_custom_call.1} parent=63 // pred_check
          %p452 = pneg %p157
        $region82: #{tpu_custom_call.1} parent=63 // pred_check_branch
          %454 = sbr.rel (%p452) target = $region84
        $region83: #{tpu_custom_call.1} parent=63 // pred_region
          %456 = dma.done [#allocation9], 256
        $region84: #{tpu_custom_call.1} parent=63 // pred_fallthru
          _
        // Predicated region
        $region85: #{tpu_custom_call.1} parent=63 // pred_check
          %p457 = pneg %p199
        $region86: #{tpu_custom_call.1} parent=63 // pred_check_branch
          %459 = sbr.rel (%p457) target = $region88
        $region87: #{tpu_custom_call.1} parent=63 // pred_region
          %461 = dma.done [#allocation12], 256
        $region88: #{tpu_custom_call.1} parent=63 // pred_fallthru
          _
        // Predicated region
        $region89: #{tpu_custom_call.1} parent=63 // pred_check
          %p462 = pneg %p241
        $region90: #{tpu_custom_call.1} parent=63 // pred_check_branch
          %464 = sbr.rel (%p462) target = $region92
        $region91: #{tpu_custom_call.1} parent=63 // pred_region
          %466 = dma.done [#allocation12], 512
        $region92: #{tpu_custom_call.1} parent=63 // pred_fallthru
          _
        %s467 = sand.u32 %s39, 1
        %s468 = scalar_lea.sflag [#allocation3], %s467
        %s469 = sand.u32 %s39, 1
        %s470 = smul.addr %s469, 8
        %s471 = scalar_lea.vmem [#allocation2], %s470
        %p472 = pneg %p52
        %p473 = pneg %p49
        %p474 = pneg %p73
        %p475 = pneg %p70
        %p476 = pneg %p94
        %p477 = pneg %p91
        %p478 = pneg %p115
        %p479 = pneg %p112
        %p480 = pneg %p136
        %p481 = pneg %p133
        %p482 = pneg %p157
        %p483 = pneg %p154
        %p484 = pneg %p178
        %p485 = pneg %p175
        %p486 = pneg %p199
        %p487 = pneg %p196
        %p488 = pneg %p220
        %p489 = pneg %p217
        %p490 = pneg %p241
        %p491 = pneg %p238
        %p492 = pneg %p262
        %p493 = pneg %p259
        %p494 = pneg %p288
        %p495 = pneg %p285
        %s496 = sand.u32 %s275, 1
        %s497 = scalar_lea.sflag [#allocation4], %s496
        %s498 = sand.u32 %s275, 1
        %s499 = smul.addr %s498, 16
        %s500 = scalar_lea.vmem [#allocation14], %s499
        %v502 = vld [vmem:[%s431] sm:$0xff]
        %v503 = vpack.c.bf16 %v502, %v502
        %v504 = vld [vmem:[#allocation5] sm:$0xf]
        %v505 = vld [vmem:[#allocation5 + $0x4] sm:$0xf]
        %v506 = vld [vmem:[%s2] sm:$0x1]
        %v508 = vperm.slane %v506, 0
        %v512 = vunpack.c.l.b16 %v504
        %v513 = vunpack.c.l.b16 %v505
        %v514 = vpack.c.b16 %v513, %v512
        %vm516 = vcmask 130048
        %v518 = vsel %vm516, %v503, 0
        %520 = vmatpush.bf16.msra.mxu0 0
        %521 = vmatpush.bf16.msra.mxu0 0
        %522 = vmatpush.bf16.msra.mxu0 0
        %523 = vmatpush.bf16.msra.mxu0 0
        %524 = vmatpush.bf16.msra.mxu0 0
        %525 = vmatpush.bf16.msra.mxu0 0
        %526 = vmatpush.bf16.msra.mxu0 0
        %527 = vmatpush.bf16.msra.mxu0 %v514
        %528 = vmatmul.bf16.gmra.mxu0 %v518
        %v529 = vpop.f32.mrf.mxu0
        %v530 = vadd.f32 %v508, %v529
        %v531 = vpop.f32.mrf.mxu0
        %532 = vdwg.mxu0
        %v533 = vmax.f32 %v530, 0.0
        %v534 = vpack.c.bf16 %v533, %v533
        %v535 = vld [vmem:[#allocation7] sm:$0xf]
        %v536 = vld [vmem:[#allocation7 + $0x4] sm:$0xf]
        %v537 = vld [vmem:[#allocation7 + $0x8] sm:$0xf]
        %v538 = vld [vmem:[#allocation7 + $0xc] sm:$0xf]
        %v539 = vld [vmem:[#allocation8] sm:$0x1]
        %v541 = vperm.slane %v539, 0
        %v547 = vunpack.c.l.b16 %v535
        %v548 = vunpack.c.l.b16 %v536
        %v549 = vunpack.c.l.b16 %v537
        %v550 = vunpack.c.l.b16 %v538
        %v551 = vpack.c.b16 %v548, %v547
        %v552 = vpack.c.b16 %v550, %v549
        %vm555 = vcmask 261120
        %v557 = vsel %vm555, %v534, 0
        %559 = vmatpush.bf16.msra.mxu0 0
        %560 = vmatpush.bf16.msra.mxu0 0
        %561 = vmatpush.bf16.msra.mxu0 0
        %562 = vmatpush.bf16.msra.mxu0 0
        %563 = vmatpush.bf16.msra.mxu0 0
        %564 = vmatpush.bf16.msra.mxu0 0
        %565 = vmatpush.bf16.msra.mxu0 %v552
        %566 = vmatpush.bf16.msra.mxu0 %v551
        %567 = vmatmul.bf16.gmra.mxu0 %v557
        %v568 = vpop.f32.mrf.mxu0
        %v569 = vadd.f32 %v541, %v568
        %v570 = vpop.f32.mrf.mxu0
        %571 = vdwg.mxu0
        %v572 = vmax.f32 %v569, 0.0
        %v573 = vpack.c.bf16 %v572, %v572
        %v574 = vld [vmem:[#allocation10] sm:$0xf]
        %v575 = vld [vmem:[#allocation10 + $0x4] sm:$0xf]
        %v576 = vld [vmem:[#allocation10 + $0x8] sm:$0xf]
        %v577 = vld [vmem:[#allocation10 + $0xc] sm:$0xf]
        %v578 = vld [vmem:[%s6] sm:$0x1]
        %v580 = vperm.slane %v578, 0
        %v586 = vunpack.c.l.b16 %v574
        %v587 = vunpack.c.l.b16 %v575
        %v588 = vunpack.c.l.b16 %v576
        %v589 = vunpack.c.l.b16 %v577
        %v590 = vpack.c.b16 %v587, %v586
        %v591 = vpack.c.b16 %v589, %v588
        %v595 = vsel %vm555, %v573, 0
        %597 = vmatpush.bf16.msra.mxu0 0
        %598 = vmatpush.bf16.msra.mxu0 0
        %599 = vmatpush.bf16.msra.mxu0 0
        %600 = vmatpush.bf16.msra.mxu0 0
        %601 = vmatpush.bf16.msra.mxu0 0
        %602 = vmatpush.bf16.msra.mxu0 0
        %603 = vmatpush.bf16.msra.mxu0 %v591
        %604 = vmatpush.bf16.msra.mxu0 %v590
        %605 = vmatmul.bf16.gmra.mxu0 %v595
        %v606 = vpop.f32.mrf.mxu0
        %v607 = vadd.f32 %v580, %v606
        %v608 = vpop.f32.mrf.mxu0
        %609 = vdwg.mxu0
        %v610 = vmax.f32 %v607, 0.0
        %v611 = vpack.c.bf16 %v610, %v610
        %v612 = vld [vmem:[#allocation11] sm:$0xf]
        %v613 = vld [vmem:[#allocation11 + $0x4] sm:$0xf]
        %v614 = vld [vmem:[#allocation11 + $0x8] sm:$0xf]
        %v615 = vld [vmem:[#allocation11 + $0xc] sm:$0xf]
        %v616 = vld [vmem:[%s8] sm:$0x1]
        %v618 = vperm.slane %v616, 0
        %v624 = vunpack.c.l.b16 %v612
        %v625 = vunpack.c.l.b16 %v613
        %v626 = vunpack.c.l.b16 %v614
        %v627 = vunpack.c.l.b16 %v615
        %v628 = vpack.c.b16 %v625, %v624
        %v629 = vpack.c.b16 %v627, %v626
        %v633 = vsel %vm555, %v611, 0
        %635 = vmatpush.bf16.msra.mxu0 0
        %636 = vmatpush.bf16.msra.mxu0 0
        %637 = vmatpush.bf16.msra.mxu0 0
        %638 = vmatpush.bf16.msra.mxu0 0
        %639 = vmatpush.bf16.msra.mxu0 0
        %640 = vmatpush.bf16.msra.mxu0 0
        %641 = vmatpush.bf16.msra.mxu0 %v629
        %642 = vmatpush.bf16.msra.mxu0 %v628
        %643 = vmatmul.bf16.gmra.mxu0 %v633
        %v644 = vpop.f32.mrf.mxu0
        %v645 = vadd.f32 %v618, %v644
        %v646 = vpop.f32.mrf.mxu0
        %647 = vdwg.mxu0
        %v648 = vmax.f32 %v645, 0.0
        %v649 = vpack.c.bf16 %v648, %v648
        %v650 = vld [vmem:[#allocation13] sm:$0xff]
        %v651 = vld [vmem:[#allocation13 + $0x8] sm:$0xff]
        %v652 = vld [vmem:[#allocation13 + $0x10] sm:$0xff]
        %v653 = vld [vmem:[#allocation13 + $0x18] sm:$0xff]
        %v654 = vld [vmem:[%s10] sm:$0x3]
        %v656 = vperm.slane %v654, 0
        %v657 = vperm.slane %v654, 1
        %v664 = vunpack.c.l.b16 %v650
        %v665 = vunpack.c.h.b16 %v650
        %v666 = vunpack.c.l.b16 %v651
        %v667 = vunpack.c.h.b16 %v651
        %v668 = vunpack.c.l.b16 %v652
        %v669 = vunpack.c.h.b16 %v652
        %v670 = vunpack.c.l.b16 %v653
        %v671 = vunpack.c.h.b16 %v653
        %v672 = vpack.c.b16 %v666, %v664
        %v673 = vpack.c.b16 %v667, %v665
        %v674 = vpack.c.b16 %v670, %v668
        %v675 = vpack.c.b16 %v671, %v669
        %v681 = vsel %vm555, %v649, 0
        %683 = vmatpush.bf16.msra.mxu0 0
        %684 = vmatpush.bf16.msra.mxu0 0
        %685 = vmatpush.bf16.msra.mxu0 0
        %686 = vmatpush.bf16.msra.mxu0 0
        %687 = vmatpush.bf16.msra.mxu0 0
        %688 = vmatpush.bf16.msra.mxu0 0
        %689 = vmatpush.bf16.msra.mxu0 %v674
        %690 = vmatpush.bf16.msra.mxu0 %v672
        %691 = vmatmul.bf16.gmra.mxu0 %v681
        %v692 = vpop.f32.mrf.mxu0
        %v693 = vadd.f32 %v656, %v692
        %v694 = vpop.f32.mrf.mxu0
        %695 = vdwg.mxu0
        %696 = vmatpush.bf16.msra.mxu0 0
        %697 = vmatpush.bf16.msra.mxu0 0
        %698 = vmatpush.bf16.msra.mxu0 0
        %699 = vmatpush.bf16.msra.mxu0 0
        %700 = vmatpush.bf16.msra.mxu0 0
        %701 = vmatpush.bf16.msra.mxu0 0
        %702 = vmatpush.bf16.msra.mxu0 %v675
        %703 = vmatpush.bf16.msra.mxu0 %v673
        %704 = vmatmul.bf16.gmra.mxu0 %v681
        %v705 = vpop.f32.mrf.mxu0
        %v706 = vadd.f32 %v657, %v705
        %v707 = vpop.f32.mrf.mxu0
        %708 = vdwg.mxu0
        %709 = vst [vmem:[%s500] sm:$0xff] %v693
        %710 = vst [vmem:[%s500 + $0x8] sm:$0xff] %v706
        %s711 = sand.u32 %s275, 1
        %s712 = scalar_lea.sflag [#allocation4], %s711
        %s713 = sand.u32 %s275, 1
        %s714 = smul.addr %s713, 16
        %s715 = scalar_lea.vmem [#allocation14], %s714
        // Predicated region
        $region93: #{tpu_custom_call.1} parent=63 // pred_check
          %p716 = pneg %p285
        $region94: #{tpu_custom_call.1} parent=63 // pred_check_branch
          %718 = sbr.rel (%p716) target = $region96
        $region95: #{tpu_custom_call.1} parent=63 // pred_region
          %720 = vsyncadd %s712, 0
          %s721 = smul.addr %s31, 2
          %s722 = smul.addr %s721, 8
          %s723 = scalar_lea.hbm %s11, %s722
          %s725 = sshll.u32 %s715, 4
          %s726 = int_to_ptr.vmem [resolvable:$true] %s725
          %s727 = sshll.u32 %s723, 4
          %s728 = int_to_ptr.hbm [resolvable:$true] %s727
          %730 = dma.vmem_to_hbm [thread:$0]  %s726, 256, %s728, %s712
        $region96: #{tpu_custom_call.1} parent=63 // pred_fallthru
          _
      $region64: #{tpu_custom_call.1} parent=5 // pred_fallthru
        _
      %p731 = scmp.le.s32.totalorder 2, %s26
      // Predicated region
      $region97: #{tpu_custom_call.1} parent=5 // pred_check
        %p732 = pneg %p731
      $region98: #{tpu_custom_call.1} parent=5 // pred_check_branch
        %734 = sbr.rel (%p732) target = $region100
      $region99: #{tpu_custom_call.1} parent=5 // pred_region
        %s735 = ssub.s32 %s26, 2
        // Predicated region
        $region101: #{tpu_custom_call.1} parent=99 // pred_check
          %p736 = pneg %p291
        $region102: #{tpu_custom_call.1} parent=99 // pred_check_branch
          %738 = sbr.rel (%p736) target = $region104
        $region103: #{tpu_custom_call.1} parent=99 // pred_region
          %s739 = sand.u32 %s276, 1
          %s740 = scalar_lea.sflag [#allocation4], %s739
          %s741 = sand.u32 %s276, 1
          %s742 = smul.addr %s741, 16
          %s743 = scalar_lea.vmem [#allocation14], %s742
          %745 = dma.done %s740, 256
        $region104: #{tpu_custom_call.1} parent=99 // pred_fallthru
          _
      $region100: #{tpu_custom_call.1} parent=5 // pred_fallthru
        _
    $region6: #{tpu_custom_call.1} parent=1 // loop_footer
      %s30 = sadd.s32 1, %s26
    $region7: #{tpu_custom_call.1} parent=1 // loop_footer_branch
      %25 = sbr.rel target = $region3
    $region8: #{tpu_custom_call.1} parent=1 // loop_exit
      _
    %746 = vsyncpa [#allocation3], 1
    %s747 = scalar_lea.sflag [#allocation3], 1
    %748 = vsyncpa %s747, 1
    %749 = vsyncpa [#allocation6], 1
    %750 = vsyncpa [#allocation9], 1
    %751 = vsyncpa [#allocation12], 1
    %752 = vsyncpa [#allocation4], 1
    %s753 = scalar_lea.sflag [#allocation4], 1
    %754 = vsyncpa %s753, 1

</llo_original>
